<compile_context>
chip_gen: v6e
topology: v6e:2x2x1
jax: 0.10.0
libtpu: 0.0.40
codegen_flags: <defaults>
</compile_context>

<pallas_src>
import functools
import math

import numpy as np
import jax
import jax.numpy as jnp
from jax.experimental import pallas as pl
from jax.experimental.pallas import tpu as pltpu


def _build_pe_table(angles: np.ndarray, dim: int) -> np.ndarray:
    """Replicates the PyTorch __init__ loop exactly (deterministic, no files)."""
    assert dim % 2 == 0, "odd dim would overrun pe[i, j+1] (same hazard as torch code)"
    A = angles.shape[0]
    pe = np.zeros((A, dim), dtype=np.float32)
    for i, angle in enumerate(angles):
        for j in range(0, dim, 2):
            pe[i, j] = math.sin(angle / 10000 ** (2 * j / dim))
            pe[i, j + 1] = math.cos(angle / 10000 ** (2 * (j + 1) / dim))
    return pe  # shape [A, dim]


def _round_up(x: int, m: int) -> int:
    return ((x + m - 1) // m) * m


def _pe_kernel(x_ref, pe_ref, o_ref, *, scale, tr, pe_resident):
    # x_ref: (TR, TL) tile of the flattened input.
    # pe_ref: resident (R_pad, 1) table (slice the row band) OR pipelined (TR, 1).
    if pe_resident:
        r0 = pl.multiple_of(pl.program_id(0) * tr, tr)
        pe = pe_ref[pl.ds(r0, tr), :]
    else:
        pe = pe_ref[...]
    # f32 compute (free in a mem-bound kernel); store at the output dtype width.
    o_ref[...] = (x_ref[...].astype(jnp.float32) * scale + pe).astype(o_ref.dtype)


def positional_encoding_forward(x: jax.Array, pe_table: jax.Array, dim: int) -> jax.Array:
    """x: [N, C, H, W]; pe_table: [N, dim] (N must equal number of angles)."""
    N, C, H, W = x.shape
    assert pe_table.shape[0] == N, "broadcast in torch requires batch == #angles"
    assert C <= pe_table.shape[1]
    scale = float(math.sqrt(dim))

    # Lane-dense flattening: rows = N*C (sublane axis), lanes = H*W (lane axis).
    R, L = N * C, H * W
    x_flat = x.reshape(R, L)
    pe_rows = pe_table[:, :C].astype(jnp.float32).reshape(R, 1)  # one scalar per row

    itemsize = jnp.dtype(x.dtype).itemsize
    sub = max(8, 32 // itemsize)          # sublane alignment: f32 -> 8, bf16 -> 16, int8 -> 32
    LANE_CAP = 4096                       # lane tile cap (multiple of 128)
    TILE_BYTES = 8 << 20                  # ~8 MiB x tile budget (byte-based, dtype-aware)

    # Lane (last) dim: full dim if it fits, else a 128-aligned cap + cdiv grid.
    TL = L if L <= LANE_CAP else LANE_CAP
    TL_pad = _round_up(TL, 128)
    # Sublane dim: byte budget / lane width, aligned; full dim if it fits.
    row_cap = max(sub, (TILE_BYTES // itemsize // TL_pad) // sub * sub)
    TR = R if R <= row_cap else row_cap
    grid_r, grid_l = pl.cdiv(R, TR), pl.cdiv(L, TL)

    # v7x megacore: if the grid collapsed to (1,1), split rows so both TCs get work.
    if grid_r == 1 and grid_l == 1 and R > sub:
        TR = _round_up(pl.cdiv(R, 2), sub)
        grid_r = pl.cdiv(R, TR)

    # pe handling: resident (constant-index block) when small, else a tiny pipelined
    # (TR, 1) block per row band (avoids a large lane-padded resident footprint).
    r_pad = grid_r * TR
    pe_resident = r_pad <= 4096           # lane-padded resident cost <= ~2 MiB per buffer
    if pe_resident:
        if r_pad > R:
            pe_rows = jnp.pad(pe_rows, ((0, r_pad - R), (0, 0)))
        pe_spec = pl.BlockSpec((r_pad, 1), lambda i, j: (0, 0))
        pe_vmem = _round_up(r_pad, 8) * 128 * 4
    else:
        pe_spec = pl.BlockSpec((TR, 1), lambda i, j: (i, 0))
        pe_vmem = _round_up(TR, 8) * 128 * 4

    # Explicit VMEM budget: double-buffered x + out tiles + pe, plus margin.
    tile_vmem = _round_up(TR, sub) * _round_up(TL, 128) * itemsize
    vmem_limit = 2 * tile_vmem + 2 * tile_vmem + 2 * pe_vmem + (8 << 20)
    vmem_limit = int(min(max(vmem_limit, 16 << 20), 48 << 20))

    kernel = functools.partial(_pe_kernel, scale=scale, tr=TR, pe_resident=pe_resident)

    out_flat = pl.pallas_call(
        kernel,
        out_shape=jax.ShapeDtypeStruct((R, L), x.dtype),
        grid_spec=pltpu.PrefetchScalarGridSpec(
            num_scalar_prefetch=0,
            grid=(grid_r, grid_l),
            in_specs=[
                pl.BlockSpec((TR, TL), lambda i, j: (i, j)),
                pe_spec,
            ],
            out_specs=pl.BlockSpec((TR, TL), lambda i, j: (i, j)),
        ),
        compiler_params=pltpu.CompilerParams(
            dimension_semantics=("parallel", "parallel"),
            vmem_limit_bytes=vmem_limit,
        ),
    )(x_flat, pe_rows)

    return out_flat.reshape(N, C, H, W)


if __name__ == "__main__":
    # Small shapes consistent with the forward pass.
    N, C, H, W = 2, 4, 16, 16
    dim = 32

    # Deterministic "parameters": angles define the PE table shape [N, dim].
    angles = np.linspace(0.0, math.pi, N).astype(np.float32)  # A == N == 2
    pe_table = jnp.asarray(_build_pe_table(angles, dim))

    key = jax.random.PRNGKey(0)
    x = jax.random.normal(key, (N, C, H, W), dtype=jnp.float32)

    out = jax.block_until_ready(positional_encoding_forward(x, pe_table, dim))

    # Reference check (plain JAX, mirrors the torch permute/broadcast/permute).
    ref = x * math.sqrt(dim) + pe_table[:, :C][:, :, None, None]
    np.testing.assert_allclose(np.asarray(out), np.asarray(ref), rtol=1e-6, atol=1e-6)

    # Unaligned shape (R=6 rows, L=225 lanes) exercises the full-dim / partial-block path.
    N2, C2, H2, W2 = 2, 3, 15, 15
    angles2 = np.linspace(0.0, math.pi, N2).astype(np.float32)
    pe_table2 = jnp.asarray(_build_pe_table(angles2, dim))
    x2 = jax.random.normal(jax.random.PRNGKey(0), (N2, C2, H2, W2), dtype=jnp.float32)
    out2 = jax.block_until_ready(positional_encoding_forward(x2, pe_table2, dim))
    ref2 = x2 * math.sqrt(dim) + pe_table2[:, :C2][:, :, None, None]
    np.testing.assert_allclose(np.asarray(out2), np.asarray(ref2), rtol=1e-6, atol=1e-6)

    # bf16 input path (f32 compute in-kernel, bf16-width store).
    xb = x.astype(jnp.bfloat16)
    out_b = jax.block_until_ready(positional_encoding_forward(xb, pe_table, dim))
    ref_b = (xb.astype(jnp.float32) * math.sqrt(dim)
             + pe_table[:, :C][:, :, None, None]).astype(jnp.bfloat16)
    np.testing.assert_allclose(
        np.asarray(out_b, dtype=np.float32), np.asarray(ref_b, dtype=np.float32),
        rtol=2e-2, atol=2e-2,
    )

    print("KERNEL_OK")
</pallas_src>

<mosaic_0001>
module attributes {stable_mosaic.version = 11 : i64} {
  func.func @_pe_kernel(%arg0: i32, %arg1: i32, %arg2: memref<8x256xf32, #tpu.memory_space<vmem>>, %arg3: memref<8x1xf32, #tpu.memory_space<vmem>>, %arg4: memref<8x256xf32, #tpu.memory_space<vmem>>) attributes {dimension_semantics = [#tpu.dimension_semantics<parallel>, #tpu.dimension_semantics<parallel>], iteration_bounds = array<i64: 1, 1>, scalar_prefetch = 0 : i64, scratch_operands = 0 : i64, tpu.core_type = #tpu.core_type<tc>, window_params = [{transform_indices = @transform_0, window_bounds = array<i64: 8, 256>}, {pipeline_mode = #tpu.pipeline_mode<synchronous>, transform_indices = @transform_1, window_bounds = array<i64: 8, 1>}, {transform_indices = @transform_2, window_bounds = array<i64: 8, 256>}]} {
    %c8_i32 = arith.constant 8 : i32
    %0 = arith.muli %arg0, %c8_i32 : i32
    %1 = tpu.assume_multiple %0, 8 : i32
    %2 = arith.index_cast %1 : i32 to index
    %c0 = arith.constant 0 : index
    %3 = vector.load %arg3[%2, %c0] : memref<8x1xf32, #tpu.memory_space<vmem>>, vector<8x1xf32>
    %c0_0 = arith.constant 0 : index
    %c0_1 = arith.constant 0 : index
    %4 = vector.load %arg2[%c0_0, %c0_1] : memref<8x256xf32, #tpu.memory_space<vmem>>, vector<8x256xf32>
    %cst = arith.constant 5.65685415 : f32
    %5 = vector.broadcast %cst : f32 to vector<8x256xf32>
    %6 = arith.mulf %4, %5 : vector<8x256xf32>
    %7 = vector.broadcast %3 : vector<8x1xf32> to vector<8x256xf32>
    %8 = arith.addf %6, %7 : vector<8x256xf32>
    %c0_2 = arith.constant 0 : index
    %c0_3 = arith.constant 0 : index
    %9 = vector.load %arg4[%c0_2, %c0_3] : memref<8x256xf32, #tpu.memory_space<vmem>>, vector<8x256xf32>
    tpu.vector_store %arg4[%c0_2, %c0_3], %8 {strides = array<i32>} : memref<8x256xf32, #tpu.memory_space<vmem>>, vector<8x256xf32>,
    return
  }
  func.func @transform_0(%arg0: i32, %arg1: i32) -> (i32, i32) {
    %c0_i32 = arith.constant 0 : i32
    return %arg0, %arg1 : i32, i32
  }
  func.func @transform_1(%arg0: i32, %arg1: i32) -> (i32, i32) {
    %c0_i32 = arith.constant 0 : i32
    %c0_i32_0 = arith.constant 0 : i32
    %c0_i32_1 = arith.constant 0 : i32
    return %c0_i32, %c0_i32_0 : i32, i32
  }
  func.func @transform_2(%arg0: i32, %arg1: i32) -> (i32, i32) {
    %c0_i32 = arith.constant 0 : i32
    return %arg0, %arg1 : i32, i32
  }
}

</mosaic_0001>

<llo_original>
// kernel: tpu_custom_call.1
$region0: #{tpu_custom_call.1}
  #allocation0 [shape = 'u32[]', space=smem, size = 0x4, offset = 0x4, fixed_abs, tag = 'smem constant byte address 0x4 - core index']
  #allocation1 [shape = 'u32[144,128]{1,0:T(1,128)}', space=vmem, size = 0x12000, scoped, tag = 'internal scratch']
  %s0 = inlined_call_operand.hbm [shape: f32[8,256], index: 0, kind: input, shape index: {}]
  %s1 = inlined_call_operand.vmem [shape: f32[8,1], index: 1, kind: input, shape index: {}]
  %s2 = inlined_call_operand.hbm [shape: f32[8,256], index: 2, kind: output, shape index: {}]
  %s3 = sld [smem:[#allocation0]]
  $region22: #{tpu_custom_call.1} parent=0
    _
  %s5 = ssub.s32 1, %s3
  %s6 = scalar_select 0, %s5, %s3
  $region1: #{tpu_custom_call.1} parent=0
    #allocation2 [shape = 'u8[8192]{0}', space=vmem, size = 0x2000, scoped, tag = 'input window, operand 0, single buffered']
    #allocation3 [shape = 's32[1]{0}', space=sflag, size = 0x4, scoped, tag = 'scoped memory for tpu_custom_call.1']
    #allocation4 [shape = 's32[1]{0}', space=sflag, size = 0x4, scoped, tag = 'scoped memory for tpu_custom_call.1']
    #allocation5 [shape = 'u8[8192]{0}', space=vmem, size = 0x2000, scoped, tag = 'output window, operand 0, single buffered']
    %7 = vsyncpa [#allocation3], 0
    %8 = vsyncpa [#allocation4], 0
    // Predicated region
    $region2: #{tpu_custom_call.1} parent=1 // pred_check
      _
    $region3: #{tpu_custom_call.1} parent=1 // pred_check_branch
      %10 = sbr.rel (0) target = $region5
    $region4: #{tpu_custom_call.1} parent=1 // pred_region
      %s12 = ssub.s32 256, 256
      %13 = vsyncadd [#allocation3], %s12
      %s15 = sshll.u32 [#allocation2], 4
      %s16 = int_to_ptr.vmem [resolvable:$true] %s15
      %18 = dma.hbm_to_vmem [thread:$0]  %s0, 256, %s16, [#allocation3]
    $region5: #{tpu_custom_call.1} parent=1 // pred_fallthru
      _
    // Predicated region
    $region6: #{tpu_custom_call.1} parent=1 // pred_check
      _
    $region7: #{tpu_custom_call.1} parent=1 // pred_check_branch
      %20 = sbr.rel (0) target = $region9
    $region8: #{tpu_custom_call.1} parent=1 // pred_region
      _
    $region9: #{tpu_custom_call.1} parent=1 // pred_fallthru
      _
    // Predicated region
    $region10: #{tpu_custom_call.1} parent=1 // pred_check
      _
    $region11: #{tpu_custom_call.1} parent=1 // pred_check_branch
      %22 = sbr.rel (0) target = $region13
    $region12: #{tpu_custom_call.1} parent=1 // pred_region
      %23 = dma.done [#allocation3], 256
    $region13: #{tpu_custom_call.1} parent=1 // pred_fallthru
      _
    %s24 = smul.u32 0, 8
    %s25 = scalar_lea.vmem %s1, %s24
    %v26 = vld [vmem:[%s25] sm:$0xff]
    %v27 = vld [vmem:[#allocation2] sm:$0xff]
    %v28 = vld [vmem:[#allocation2 + $0x8] sm:$0xff]
    %v29 = vmul.f32 %v27, 5.656854
    %v30 = vmul.f32 %v28, 5.656854
    %32 = vset.pattern.permute.xlu0 0
    %33 = vperm.xlu0 %32, %v26
    %v34 = vpop.permute.xlu0 %33
    %v36 = vadd.f32 %v29, %v34
    %v37 = vadd.f32 %v30, %v34
    %38 = vst [vmem:[#allocation5] sm:$0xff] %v36
    %39 = vst [vmem:[#allocation5 + $0x8] sm:$0xff] %v37
    // Predicated region
    $region14: #{tpu_custom_call.1} parent=1 // pred_check
      _
    $region15: #{tpu_custom_call.1} parent=1 // pred_check_branch
      %41 = sbr.rel (0) target = $region17
    $region16: #{tpu_custom_call.1} parent=1 // pred_region
      %s43 = ssub.s32 256, 256
      %44 = vsyncadd [#allocation4], %s43
      %s46 = sshll.u32 [#allocation5], 4
      %s47 = int_to_ptr.vmem [resolvable:$true] %s46
      %49 = dma.vmem_to_hbm [thread:$0]  %s47, 256, %s2, [#allocation4]
    $region17: #{tpu_custom_call.1} parent=1 // pred_fallthru
      _
    // Predicated region
    $region18: #{tpu_custom_call.1} parent=1 // pred_check
      _
    $region19: #{tpu_custom_call.1} parent=1 // pred_check_branch
      %51 = sbr.rel (0) target = $region21
    $region20: #{tpu_custom_call.1} parent=1 // pred_region
      %52 = dma.done [#allocation4], 256
    $region21: #{tpu_custom_call.1} parent=1 // pred_fallthru
      _
    %53 = vsyncpa [#allocation3], 1
    %54 = vsyncpa [#allocation4], 1

</llo_original>
